<compile_context>
chip_gen: v6e
topology: v6e:2x2x1
jax: 0.10.0
libtpu: 0.0.40
codegen_flags: <defaults>
</compile_context>

<pallas_src>
import functools
import math

import jax
import jax.numpy as jnp
from jax.experimental import pallas as pl
from jax.experimental.pallas import tpu as pltpu


# ---------------------------------------------------------------------------
# Device / tiling helpers
# ---------------------------------------------------------------------------

_SUBLANE_PACK = {4: 8, 2: 16, 1: 32}   # itemsize -> sublane packing (rows per native tile)


def _cdiv(a, b):
    return -(-a // b)


def _round_up(x, m):
    return _cdiv(x, m) * m


def _vmem_capacity_bytes():
    try:
        return int(pltpu.get_tpu_info().vmem_capacity_bytes)   # per-TensorCore VMEM
    except Exception:
        return 64 * 1024 * 1024                                # conservative (v7x-sized) fallback


def _vmem_limit_bytes():
    # Raise the scoped-VMEM limit so large tiles keep double-buffering; leave headroom.
    return int(min(_vmem_capacity_bytes() * 3 // 4, 96 * 1024 * 1024))


def _compiler_params():
    return pltpu.CompilerParams(
        dimension_semantics=("parallel",),
        vmem_limit_bytes=_vmem_limit_bytes(),
    )


def _choose_rows_block(n_rows, bytes_per_row, fixed_bytes=0, sublane=8):
    """Row-tile size: VMEM-budgeted (3/8 of per-TC capacity), sublane-aligned, no padding.

    Returns rb such that rb == n_rows (single full block) or rb % sublane == 0.  A ragged last
    block is handled by grid=cdiv + in-kernel masking, never by jnp.pad in the wrapper.
    """
    budget = _vmem_capacity_bytes() * 3 // 8 - fixed_bytes
    budget = max(budget, bytes_per_row * sublane)
    target = min(max(sublane, budget // max(bytes_per_row, 1)), 1024)
    if n_rows <= target:
        return n_rows                              # one block covering the full dim
    rb = max(sublane, (target // sublane) * sublane)
    nblk = _cdiv(n_rows, rb)
    # v7x shards a "parallel" grid axis across 2 TCs: avoid short odd grids (e.g. 3 blocks).
    if nblk % 2 == 1 and nblk < 8:
        rb = max(sublane, min(rb, _round_up(_cdiv(n_rows, nblk + 1), sublane)))
    return rb


# ---------------------------------------------------------------------------
# Conv1D (rf == 1): y = x @ w + b, optional fused activation
# ---------------------------------------------------------------------------

def _gelu_f32(x):
    return 0.5 * x * (1.0 + jnp.tanh(0.7978845608028654 * (x + 0.044715 * x * x * x)))


def _dense_kernel(x_ref, w_ref, b_ref, o_ref, *, activation):
    y = jnp.dot(x_ref[...], w_ref[...], preferred_element_type=jnp.float32)
    y = y + b_ref[...]
    if activation == "gelu":
        y = _gelu_f32(y)
    elif activation == "relu":
        y = jnp.maximum(y, 0.0)
    elif activation == "swish":
        y = y * jax.nn.sigmoid(y)
    o_ref[...] = y.astype(o_ref.dtype)


def conv1d(x, w, b, activation=None):
    """Conv1D with rf=1 (a dense layer over the last axis), optional fused activation."""
    orig = x.shape
    K = orig[-1]
    N = w.shape[-1]
    x2 = x.reshape(-1, K)
    M = x2.shape[0]
    item = jnp.dtype(x.dtype).itemsize
    sub = _SUBLANE_PACK.get(item, 8)
    fixed = 2 * (K * N + N) * item                  # (double-buffered) resident weight + bias
    per_row = 2 * (K + N) * item + 2 * N * 4        # 2x-buffered x/out tiles + f32 temporaries
    tm = _choose_rows_block(M, per_row, fixed, sub)

    out = pl.pallas_call(
        functools.partial(_dense_kernel, activation=activation),
        out_shape=jax.ShapeDtypeStruct((M, N), x.dtype),
        grid=(_cdiv(M, tm),),
        in_specs=[
            pl.BlockSpec((tm, K), lambda i: (i, 0)),
            pl.BlockSpec((K, N), lambda i: (0, 0)),
            pl.BlockSpec((1, N), lambda i: (0, 0)),
        ],
        out_specs=pl.BlockSpec((tm, N), lambda i: (i, 0)),
        compiler_params=_compiler_params(),
    )(x2, w, b.astype(jnp.float32).reshape(1, N))
    return out.reshape(orig[:-1] + (N,))


# ---------------------------------------------------------------------------
# Causal multi-head attention core (operates on the fused QKV projection)
# ---------------------------------------------------------------------------

def _attention_kernel(qkv_ref, o_ref, *, n_head, scale):
    qkv = qkv_ref[0].astype(jnp.float32)            # (T, 3C)
    t = qkv.shape[0]
    c = qkv.shape[1] // 3
    hd = c // n_head
    row = jax.lax.broadcasted_iota(jnp.int32, (t, t), 0)
    col = jax.lax.broadcasted_iota(jnp.int32, (t, t), 1)
    causal = row >= col
    outs = []
    for h in range(n_head):                         # static unroll over heads
        q = qkv[:, h * hd:(h + 1) * hd]
        k = qkv[:, c + h * hd:c + (h + 1) * hd]
        v = qkv[:, 2 * c + h * hd:2 * c + (h + 1) * hd]
        s = jax.lax.dot_general(q, k, (((1,), (1,)), ((), ())),
                                preferred_element_type=jnp.float32)   # (T, T)
        if scale:
            s = s * (1.0 / math.sqrt(hd))
        s = jnp.where(causal, s, -1e9)
        s = s - jnp.max(s, axis=-1, keepdims=True)
        p = jnp.exp(s)
        p = p / jnp.sum(p, axis=-1, keepdims=True)
        outs.append(jnp.dot(p, v, preferred_element_type=jnp.float32))
    # Heads written as contiguous feature slices == torch's merge_heads layout.
    o_ref[0] = jnp.concatenate(outs, axis=-1).astype(o_ref.dtype)


def causal_attention(qkv, *, n_head, scale):
    B, T, C3 = qkv.shape
    C = C3 // 3
    return pl.pallas_call(
        functools.partial(_attention_kernel, n_head=n_head, scale=scale),
        out_shape=jax.ShapeDtypeStruct((B, T, C), qkv.dtype),
        grid=(B,),
        in_specs=[pl.BlockSpec((1, T, C3), lambda b: (b, 0, 0))],
        out_specs=pl.BlockSpec((1, T, C), lambda b: (b, 0, 0)),
        compiler_params=_compiler_params(),
    )(qkv)


# ---------------------------------------------------------------------------
# Fused residual + OpenAI-style LayerNorm:  out = LN(x + y)
# ---------------------------------------------------------------------------

def _add_ln_rows_kernel(x_ref, y_ref, g_ref, b_ref, o_ref, *, eps, inv_h, n_valid, ragged):
    v = x_ref[...].astype(jnp.float32) + y_ref[...].astype(jnp.float32)
    if ragged:                                      # mask rows past the real array end
        rows = (pl.program_id(0) * x_ref.shape[0]
                + jax.lax.broadcasted_iota(jnp.int32, v.shape, 0))
        v = jnp.where(rows < n_valid, v, 0.0)
    mean = jnp.sum(v, axis=-1, keepdims=True) * inv_h
    ex2 = jnp.sum(v * v, axis=-1, keepdims=True) * inv_h
    var = jnp.maximum(ex2 - mean * mean, 0.0)       # clamp one-pass variance
    inv = jax.lax.rsqrt(var + eps)                  # eps inside the sqrt (EUP)
    o_ref[...] = (((v - mean) * inv) * g_ref[...] + b_ref[...]).astype(o_ref.dtype)


def _add_ln_packed_kernel(x_ref, y_ref, g_ref, b_ref, m_ref, o_ref, *, eps, n_valid, ragged):
    """Lane-dense path for H < 128: each 128-lane row holds 128/H original rows; the grouped
    mean / E[x^2] are broadcast back to their group's lanes by a (128,128) averaging matmul."""
    v = x_ref[...].astype(jnp.float32) + y_ref[...].astype(jnp.float32)   # (rb, 128)
    if ragged:
        rows = (pl.program_id(0) * x_ref.shape[0]
                + jax.lax.broadcasted_iota(jnp.int32, v.shape, 0))
        v = jnp.where(rows < n_valid, v, 0.0)
    vm = v.astype(m_ref.dtype)                      # bf16 operands when input is bf16 (v5e MXU)
    mean = jnp.dot(vm, m_ref[...], preferred_element_type=jnp.float32)
    ex2 = jnp.dot(vm * vm, m_ref[...], preferred_element_type=jnp.float32)
    var = jnp.maximum(ex2 - mean * mean, 0.0)
    inv = jax.lax.rsqrt(var + eps)
    o_ref[...] = (((v - mean) * inv) * g_ref[...] + b_ref[...]).astype(o_ref.dtype)


def add_layer_norm(x, y, g, b, eps=1e-5):
    """LN(x + y) over the last axis (OpenAI LayerNorm, eps inside sqrt), residual fused."""
    orig = x.shape
    H = orig[-1]
    x2 = x.reshape(-1, H)
    y2 = y.reshape(-1, H)
    n_rows = x2.shape[0]
    item = jnp.dtype(x.dtype).itemsize
    sub = _SUBLANE_PACK.get(item, 8)
    g32 = g.astype(jnp.float32)
    b32 = b.astype(jnp.float32)

    pack = 128 // H if (H < 128 and 128 % H == 0) else 0
    if pack and n_rows % pack == 0:
        # ---- Lane-dense packed path (full-width vst instead of masked vst.msk) ----
        n_packed = n_rows // pack
        xp = x2.reshape(n_packed, 128)              # contiguous reshape: no HBM copy
        yp = y2.reshape(n_packed, 128)
        mm_dtype = jnp.bfloat16 if x.dtype == jnp.bfloat16 else jnp.float32
        lane = jnp.arange(128)
        grp = ((lane[:, None] // H) == (lane[None, :] // H)).astype(mm_dtype) / H
        g_p = jnp.tile(g32, pack).reshape(1, 128)
        b_p = jnp.tile(b32, pack).reshape(1, 128)

        per_row = 3 * 2 * 128 * item + 3 * 128 * 4          # x/y/out double-buffered + f32 temps
        fixed = 2 * (128 * 128 * jnp.dtype(mm_dtype).itemsize + 2 * 128 * 4)
        rb = _choose_rows_block(n_packed, per_row, fixed, sub)
        ragged = (n_packed % rb) != 0

        out = pl.pallas_call(
            functools.partial(_add_ln_packed_kernel, eps=eps, n_valid=n_packed, ragged=ragged),
            out_shape=jax.ShapeDtypeStruct((n_packed, 128), x.dtype),
            grid=(_cdiv(n_packed, rb),),
            in_specs=[
                pl.BlockSpec((rb, 128), lambda i: (i, 0)),
                pl.BlockSpec((rb, 128), lambda i: (i, 0)),
                pl.BlockSpec((1, 128), lambda i: (0, 0)),
                pl.BlockSpec((1, 128), lambda i: (0, 0)),
                pl.BlockSpec((128, 128), lambda i: (0, 0)),
            ],
            out_specs=pl.BlockSpec((rb, 128), lambda i: (i, 0)),
            compiler_params=_compiler_params(),
        )(xp, yp, g_p, b_p, grp)
        return out.reshape(orig)

    # ---- Standard row-tiled path (H >= 128, or sizes the packed layout can't take) ----
    per_row = 3 * 2 * H * item + 3 * H * 4
    fixed = 2 * 2 * H * 4
    rb = _choose_rows_block(n_rows, per_row, fixed, sub)
    ragged = (n_rows % rb) != 0

    out = pl.pallas_call(
        functools.partial(_add_ln_rows_kernel, eps=eps, inv_h=1.0 / H,
                          n_valid=n_rows, ragged=ragged),
        out_shape=jax.ShapeDtypeStruct((n_rows, H), x.dtype),
        grid=(_cdiv(n_rows, rb),),
        in_specs=[
            pl.BlockSpec((rb, H), lambda i: (i, 0)),
            pl.BlockSpec((rb, H), lambda i: (i, 0)),
            pl.BlockSpec((1, H), lambda i: (0, 0)),
            pl.BlockSpec((1, H), lambda i: (0, 0)),
        ],
        out_specs=pl.BlockSpec((rb, H), lambda i: (i, 0)),
        compiler_params=_compiler_params(),
    )(x2, y2, g32.reshape(1, H), b32.reshape(1, H))
    return out.reshape(orig)


# ---------------------------------------------------------------------------
# Block forward
# ---------------------------------------------------------------------------

def block_forward(x, params, *, n_head, scale=False, eps=1e-5, afn="gelu"):
    """h = ln_2(n + MLP(n)),  n = ln_1(x + Attention(x))  — same as Block.forward."""
    qkv = conv1d(x, params["w_attn"], params["b_attn"])                 # c_attn
    a = causal_attention(qkv, n_head=n_head, scale=scale)               # masked softmax attn
    a = conv1d(a, params["w_aproj"], params["b_aproj"])                 # attention c_proj
    n = add_layer_norm(x, a, params["g1"], params["b1"], eps=eps)       # ln_1(x + a), fused
    h = conv1d(n, params["w_fc"], params["b_fc"], activation=afn)       # c_fc + activation
    m = conv1d(h, params["w_mproj"], params["b_mproj"])                 # mlp c_proj
    return add_layer_norm(n, m, params["g2"], params["b2"], eps=eps)    # ln_2(n + m), fused


# ---------------------------------------------------------------------------
# Pure-JAX reference (mirrors the PyTorch module) and self-check
# ---------------------------------------------------------------------------

def _reference_block(x, p, *, n_head, scale, eps, afn="gelu"):
    def dense(t, w, b):
        return t @ w + b

    def ln(t, g, b):
        u = t.mean(-1, keepdims=True)
        s = ((t - u) ** 2).mean(-1, keepdims=True)
        return g * ((t - u) / jnp.sqrt(s + eps)) + b

    def act(t):
        if afn == "gelu":
            return 0.5 * t * (1 + jnp.tanh(jnp.sqrt(2 / jnp.pi) * (t + 0.044715 * t ** 3)))
        if afn == "relu":
            return jnp.maximum(t, 0.0)
        return t * jax.nn.sigmoid(t)

    B, T, C = x.shape
    hd = C // n_head
    qkv = dense(x, p["w_attn"], p["b_attn"])
    q, k, v = jnp.split(qkv, 3, axis=-1)

    def split(t):
        return t.reshape(B, T, n_head, hd).transpose(0, 2, 1, 3)

    q, k, v = split(q), split(k), split(v)
    w = jnp.einsum("bhqd,bhkd->bhqk", q, k)
    if scale:
        w = w / math.sqrt(hd)
    mask = jnp.tril(jnp.ones((T, T), x.dtype))
    w = w * mask + -1e9 * (1 - mask)
    w = jax.nn.softmax(w, axis=-1)
    a = jnp.einsum("bhqk,bhkd->bhqd", w, v).transpose(0, 2, 1, 3).reshape(B, T, C)
    a = dense(a, p["w_aproj"], p["b_aproj"])
    n = ln(x + a, p["g1"], p["b1"])
    m = dense(act(dense(n, p["w_fc"], p["b_fc"])), p["w_mproj"], p["b_mproj"])
    return ln(n + m, p["g2"], p["b2"])


def _make_params(key, n_embd):
    ks = jax.random.split(key, 8)
    std = 0.02
    return {
        "w_attn": std * jax.random.normal(ks[0], (n_embd, 3 * n_embd), jnp.float32),
        "b_attn": jnp.zeros((3 * n_embd,), jnp.float32),
        "w_aproj": std * jax.random.normal(ks[1], (n_embd, n_embd), jnp.float32),
        "b_aproj": jnp.zeros((n_embd,), jnp.float32),
        "g1": 1.0 + 0.1 * jax.random.normal(ks[2], (n_embd,), jnp.float32),
        "b1": 0.1 * jax.random.normal(ks[3], (n_embd,), jnp.float32),
        "w_fc": std * jax.random.normal(ks[4], (n_embd, 4 * n_embd), jnp.float32),
        "b_fc": jnp.zeros((4 * n_embd,), jnp.float32),
        "w_mproj": std * jax.random.normal(ks[5], (4 * n_embd, n_embd), jnp.float32),
        "b_mproj": jnp.zeros((n_embd,), jnp.float32),
        "g2": 1.0 + 0.1 * jax.random.normal(ks[6], (n_embd,), jnp.float32),
        "b2": 0.1 * jax.random.normal(ks[7], (n_embd,), jnp.float32),
    }


if __name__ == "__main__":
    key = jax.random.PRNGKey(0)

    # Small shapes implied by Block.forward: x is [batch, seq, n_embd]; H=32 exercises the
    # lane-dense packed LayerNorm path.
    batch, seq, n_embd, n_head = 2, 8, 32, 4
    k_par, k_x, k_par2, k_x2 = jax.random.split(key, 4)
    params = _make_params(k_par, n_embd)
    x = jax.random.normal(k_x, (batch, seq, n_embd), jnp.float32)

    out = jax.block_until_ready(block_forward(x, params, n_head=n_head, scale=True))
    ref = _reference_block(x, params, n_head=n_head, scale=True, eps=1e-5)
    assert out.shape == ref.shape
    err = float(jnp.max(jnp.abs(out - ref)))
    assert jnp.allclose(out, ref, atol=2e-3, rtol=2e-3), f"mismatch (packed LN path): {err}"

    # Second config exercises the standard row-tiled LayerNorm path (H multiple of 128)
    # and the unscaled-attention branch.
    b2_, s2_, h2_, nh2_ = 2, 16, 128, 8
    params2 = _make_params(k_par2, h2_)
    x2 = jax.random.normal(k_x2, (b2_, s2_, h2_), jnp.float32)
    out2 = jax.block_until_ready(block_forward(x2, params2, n_head=nh2_, scale=False))
    ref2 = _reference_block(x2, params2, n_head=nh2_, scale=False, eps=1e-5)
    err2 = float(jnp.max(jnp.abs(out2 - ref2)))
    assert jnp.allclose(out2, ref2, atol=2e-3, rtol=2e-3), f"mismatch (rows LN path): {err2}"

    print("KERNEL_OK")
</pallas_src>

<mosaic_0001>
module attributes {stable_mosaic.version = 11 : i64} {
  func.func @_dense_kernel(%arg0: i32, %arg1: memref<16x32xf32, #tpu.memory_space<vmem>>, %arg2: memref<32x96xf32, #tpu.memory_space<vmem>>, %arg3: memref<1x96xf32, #tpu.memory_space<vmem>>, %arg4: memref<16x96xf32, #tpu.memory_space<vmem>>) attributes {dimension_semantics = [#tpu.dimension_semantics<parallel>], iteration_bounds = array<i64: 1>, scalar_prefetch = 0 : i64, scratch_operands = 0 : i64, tpu.core_type = #tpu.core_type<tc>, window_params = [{transform_indices = @transform_0, window_bounds = array<i64: 16, 32>}, {pipeline_mode = #tpu.pipeline_mode<synchronous>, transform_indices = @transform_1, window_bounds = array<i64: 32, 96>}, {pipeline_mode = #tpu.pipeline_mode<synchronous>, transform_indices = @transform_2, window_bounds = array<i64: 1, 96>}, {transform_indices = @transform_3, window_bounds = array<i64: 16, 96>}]} {
    %c0 = arith.constant 0 : index
    %c0_0 = arith.constant 0 : index
    %0 = vector.load %arg1[%c0, %c0_0] : memref<16x32xf32, #tpu.memory_space<vmem>>, vector<16x32xf32>
    %c0_1 = arith.constant 0 : index
    %c0_2 = arith.constant 0 : index
    %1 = vector.load %arg2[%c0_1, %c0_2] : memref<32x96xf32, #tpu.memory_space<vmem>>, vector<32x96xf32>
    %cst = arith.constant dense<0.000000e+00> : vector<16x96xf32>
    %2 = tpu.matmul %0, %1, %cst {dimension_numbers = #tpu.dot_dimension_numbers<[1], [0], [0], [1], [0, 0, 1, 1], [], []>} : vector<16x32xf32>, vector<32x96xf32>, vector<16x96xf32> -> vector<16x96xf32>
    %c0_3 = arith.constant 0 : index
    %c0_4 = arith.constant 0 : index
    %3 = vector.load %arg3[%c0_3, %c0_4] : memref<1x96xf32, #tpu.memory_space<vmem>>, vector<1x96xf32>
    %4 = vector.broadcast %3 : vector<1x96xf32> to vector<16x96xf32>
    %5 = arith.addf %2, %4 : vector<16x96xf32>
    %c0_5 = arith.constant 0 : index
    %c0_6 = arith.constant 0 : index
    %6 = vector.load %arg4[%c0_5, %c0_6] : memref<16x96xf32, #tpu.memory_space<vmem>>, vector<16x96xf32>
    tpu.vector_store %arg4[%c0_5, %c0_6], %5 {strides = array<i32>} : memref<16x96xf32, #tpu.memory_space<vmem>>, vector<16x96xf32>,
    return
  }
  func.func @transform_0(%arg0: i32) -> (i32, i32) {
    %c0_i32 = arith.constant 0 : i32
    %c0_i32_0 = arith.constant 0 : i32
    return %arg0, %c0_i32 : i32, i32
  }
  func.func @transform_1(%arg0: i32) -> (i32, i32) {
    %c0_i32 = arith.constant 0 : i32
    %c0_i32_0 = arith.constant 0 : i32
    %c0_i32_1 = arith.constant 0 : i32
    return %c0_i32, %c0_i32_0 : i32, i32
  }
  func.func @transform_2(%arg0: i32) -> (i32, i32) {
    %c0_i32 = arith.constant 0 : i32
    %c0_i32_0 = arith.constant 0 : i32
    %c0_i32_1 = arith.constant 0 : i32
    return %c0_i32, %c0_i32_0 : i32, i32
  }
  func.func @transform_3(%arg0: i32) -> (i32, i32) {
    %c0_i32 = arith.constant 0 : i32
    %c0_i32_0 = arith.constant 0 : i32
    return %arg0, %c0_i32 : i32, i32
  }
}

</mosaic_0001>

<llo_original>
// kernel: tpu_custom_call.1
$region0: #{tpu_custom_call.1}
  #allocation0 [shape = 'u32[]', space=smem, size = 0x4, offset = 0x4, fixed_abs, tag = 'smem constant byte address 0x4 - core index']
  #allocation1 [shape = 'u32[144,128]{1,0:T(1,128)}', space=vmem, size = 0x12000, scoped, tag = 'internal scratch']
  %s0 = inlined_call_operand.hbm [shape: f32[16,32], index: 0, kind: input, shape index: {}]
  %s1 = inlined_call_operand.hbm [shape: f32[32,96], index: 1, kind: input, shape index: {}]
  %s2 = inlined_call_operand.vmem [shape: f32[1,96], index: 2, kind: input, shape index: {}]
  %s3 = inlined_call_operand.hbm [shape: f32[16,96], index: 3, kind: output, shape index: {}]
  %s4 = sld [smem:[#allocation0]]
  $region30: #{tpu_custom_call.1} parent=0
    _
  %s6 = ssub.s32 1, %s4
  %s7 = scalar_select 0, %s6, %s4
  $region1: #{tpu_custom_call.1} parent=0
    #allocation2 [shape = 'u8[8192]{0}', space=vmem, size = 0x2000, scoped, tag = 'input window, operand 0, single buffered']
    #allocation3 [shape = 's32[1]{0}', space=sflag, size = 0x4, scoped, tag = 'scoped memory for tpu_custom_call.1']
    #allocation4 [shape = 's32[1]{0}', space=sflag, size = 0x4, scoped, tag = 'scoped memory for tpu_custom_call.1']
    #allocation5 [shape = 'u8[16384]{0}', space=vmem, size = 0x4000, scoped, tag = 'input window, operand 1, single buffered']
    #allocation6 [shape = 's32[1]{0}', space=sflag, size = 0x4, scoped, tag = 'scoped memory for tpu_custom_call.1']
    #allocation7 [shape = 'u8[8192]{0}', space=vmem, size = 0x2000, scoped, tag = 'output window, operand 0, single buffered']
    %8 = vsyncpa [#allocation3], 0
    %9 = vsyncpa [#allocation6], 0
    %10 = vsyncpa [#allocation4], 0
    // Predicated region
    $region2: #{tpu_custom_call.1} parent=1 // pred_check
      _
    $region3: #{tpu_custom_call.1} parent=1 // pred_check_branch
      %12 = sbr.rel (0) target = $region5
    $region4: #{tpu_custom_call.1} parent=1 // pred_region
      %s14 = ssub.s32 256, 256
      %15 = vsyncadd [#allocation3], %s14
      %s16 = sshll.u32 [#allocation2], 4
      %s17 = int_to_ptr.vmem [resolvable:$true] %s16
      %22 = dma.hbm_to_vmem [thread:$0]  %s0, 256, %s17, [#allocation3], 128, 128, 8
    $region5: #{tpu_custom_call.1} parent=1 // pred_fallthru
      _
    // Predicated region
    $region6: #{tpu_custom_call.1} parent=1 // pred_check
      _
    $region7: #{tpu_custom_call.1} parent=1 // pred_check_branch
      %24 = sbr.rel (0) target = $region9
    $region8: #{tpu_custom_call.1} parent=1 // pred_region
      %s26 = ssub.s32 512, 512
      %27 = vsyncadd [#allocation6], %s26
      %s28 = sshll.u32 [#allocation5], 4
      %s29 = int_to_ptr.vmem [resolvable:$true] %s28
      %34 = dma.hbm_to_vmem [thread:$0]  %s1, 512, %s29, [#allocation6], 128, 128, 8
    $region9: #{tpu_custom_call.1} parent=1 // pred_fallthru
      _
    // Predicated region
    $region10: #{tpu_custom_call.1} parent=1 // pred_check
      _
    $region11: #{tpu_custom_call.1} parent=1 // pred_check_branch
      %36 = sbr.rel (0) target = $region13
    $region12: #{tpu_custom_call.1} parent=1 // pred_region
      _
    $region13: #{tpu_custom_call.1} parent=1 // pred_fallthru
      _
    // Predicated region
    $region14: #{tpu_custom_call.1} parent=1 // pred_check
      _
    $region15: #{tpu_custom_call.1} parent=1 // pred_check_branch
      %38 = sbr.rel (0) target = $region17
    $region16: #{tpu_custom_call.1} parent=1 // pred_region
      %39 = dma.done [#allocation3], 256
    $region17: #{tpu_custom_call.1} parent=1 // pred_fallthru
      _
    // Predicated region
    $region18: #{tpu_custom_call.1} parent=1 // pred_check
      _
    $region19: #{tpu_custom_call.1} parent=1 // pred_check_branch
      %41 = sbr.rel (0) target = $region21
    $region20: #{tpu_custom_call.1} parent=1 // pred_region
      %42 = dma.done [#allocation6], 512
    $region21: #{tpu_custom_call.1} parent=1 // pred_fallthru
      _
    %v43 = vld [vmem:[#allocation2] sm:$0xff]
    %v44 = vld [vmem:[#allocation2 + $0x8] sm:$0xff]
    %v45 = vld [vmem:[#allocation5] sm:$0xff]
    %v46 = vld [vmem:[#allocation5 + $0x8] sm:$0xff]
    %v47 = vld [vmem:[#allocation5 + $0x10] sm:$0xff]
    %v48 = vld [vmem:[#allocation5 + $0x18] sm:$0xff]
    %v49 = vld [vmem:[%s2] sm:$0x1]
    %v51 = vlaneseq
    %v52 = vshrl.u32 %v51, 7
    %v53 = vsub.s32 0, %v52
    %v54 = vrot.slane %v49, %v53
    %vm56 = vcmask 261120
    %v58 = vsel %vm56, %v43, 0
    %v61 = vsel %vm56, %v44, 0
    %63 = vmatprep.subr.mxu0 0.0
    %64 = vmatpush1.msra.mxu0 0.0
    %65 = vmatprep.subr.mxu0 0.0
    %66 = vmatpush1.msra.mxu0 0.0
    %67 = vmatprep.subr.mxu0 0.0
    %68 = vmatpush1.msra.mxu0 0.0
    %69 = vmatprep.subr.mxu0 0.0
    %70 = vmatpush1.msra.mxu0 0.0
    %71 = vmatprep.subr.mxu0 0.0
    %72 = vmatpush1.msra.mxu0 0.0
    %73 = vmatprep.subr.mxu0 0.0
    %74 = vmatpush1.msra.mxu0 0.0
    %75 = vmatprep.subr.mxu0 0.0
    %76 = vmatpush1.msra.mxu0 0.0
    %77 = vmatprep.subr.mxu0 0.0
    %78 = vmatpush1.msra.mxu0 0.0
    %79 = vmatprep.subr.mxu0 0.0
    %80 = vmatpush1.msra.mxu0 0.0
    %81 = vmatprep.subr.mxu0 0.0
    %82 = vmatpush1.msra.mxu0 0.0
    %83 = vmatprep.subr.mxu0 0.0
    %84 = vmatpush1.msra.mxu0 0.0
    %85 = vmatprep.subr.mxu0 0.0
    %86 = vmatpush1.msra.mxu0 0.0
    %87 = vmatprep.subr.mxu0 0.0
    %88 = vmatpush1.msra.mxu0 %v48
    %89 = vmatprep.subr.mxu0 0.0
    %90 = vmatpush1.msra.mxu0 %v47
    %91 = vmatprep.subr.mxu0 0.0
    %92 = vmatpush1.msra.mxu0 %v46
    %93 = vmatprep.subr.mxu0 0.0
    %94 = vmatpush1.msra.mxu0 %v45
    %95 = vmatprep.subr.mxu0 0.0
    %96 = vmatpush2.msra.mxu0 0.0
    %97 = vmatprep.subr.mxu0 0.0
    %98 = vmatpush2.msra.mxu0 0.0
    %99 = vmatprep.subr.mxu0 0.0
    %100 = vmatpush2.msra.mxu0 0.0
    %101 = vmatprep.subr.mxu0 0.0
    %102 = vmatpush2.msra.mxu0 0.0
    %103 = vmatprep.subr.mxu0 0.0
    %104 = vmatpush2.msra.mxu0 0.0
    %105 = vmatprep.subr.mxu0 0.0
    %106 = vmatpush2.msra.mxu0 0.0
    %107 = vmatprep.subr.mxu0 0.0
    %108 = vmatpush2.msra.mxu0 0.0
    %109 = vmatprep.subr.mxu0 0.0
    %110 = vmatpush2.msra.mxu0 0.0
    %111 = vmatprep.subr.mxu0 0.0
    %112 = vmatpush2.msra.mxu0 0.0
    %113 = vmatprep.subr.mxu0 0.0
    %114 = vmatpush2.msra.mxu0 0.0
    %115 = vmatprep.subr.mxu0 0.0
    %116 = vmatpush2.msra.mxu0 0.0
    %117 = vmatprep.subr.mxu0 0.0
    %118 = vmatpush2.msra.mxu0 0.0
    %119 = vmatprep.subr.mxu0 0.0
    %120 = vmatpush2.msra.mxu0 0.0
    %121 = vmatprep.subr.mxu0 0.0
    %122 = vmatpush2.msra.mxu0 0.0
    %123 = vmatprep.subr.mxu0 0.0
    %124 = vmatpush2.msra.mxu0 0.0
    %125 = vmatprep.subr.mxu0 0.0
    %126 = vmatpush2.msra.mxu0 0.0
    %127 = vmatprep.mubr.f32.mxu0 0.0
    %128 = vmatmul.mubr.f32.gmra.mxu0 %v58
    %v129 = vpop.f32.mrf.mxu0
    %v130 = vadd.f32 %v54, %v129
    %v131 = vpop.f32.mrf.mxu0
    %132 = vmatprep.mubr.f32.mxu0 0.0
    %133 = vmatmul.mubr.f32.gmra.mxu0 %v61
    %v134 = vpop.f32.mrf.mxu0
    %v135 = vadd.f32 %v54, %v134
    %v136 = vpop.f32.mrf.mxu0
    %137 = vdwg.mxu0
    %vm138 = vcmask 785408
    %139 = vst.msk [vmem:[#allocation7] sm:$0xff] %vm138, %v130
    %140 = vst.msk [vmem:[#allocation7 + $0x8] sm:$0xff] %vm138, %v135
    // Predicated region
    $region22: #{tpu_custom_call.1} parent=1 // pred_check
      _
    $region23: #{tpu_custom_call.1} parent=1 // pred_check_branch
      %142 = sbr.rel (0) target = $region25
    $region24: #{tpu_custom_call.1} parent=1 // pred_region
      %s144 = ssub.s32 256, 256
      %145 = vsyncadd [#allocation4], %s144
      %s146 = sshll.u32 [#allocation7], 4
      %s147 = int_to_ptr.vmem [resolvable:$true] %s146
      %152 = dma.vmem_to_hbm [thread:$0]  %s147, 256, %s3, [#allocation4], 128, 128, 8
    $region25: #{tpu_custom_call.1} parent=1 // pred_fallthru
      _
    // Predicated region
    $region26: #{tpu_custom_call.1} parent=1 // pred_check
      _
    $region27: #{tpu_custom_call.1} parent=1 // pred_check_branch
      %154 = sbr.rel (0) target = $region29
    $region28: #{tpu_custom_call.1} parent=1 // pred_region
      %155 = dma.done [#allocation4], 256
    $region29: #{tpu_custom_call.1} parent=1 // pred_fallthru
      _
    %156 = vsyncpa [#allocation3], 1
    %157 = vsyncpa [#allocation6], 1
    %158 = vsyncpa [#allocation4], 1

</llo_original>
